<compile_context>
chip_gen: v7x
topology: tpu7x:2x2x1
jax: 0.10.0
libtpu: 0.0.40
codegen_flags: <defaults>
</compile_context>

<pallas_src>
import math

import jax
import jax.numpy as jnp
import numpy as np
from jax.experimental import pallas as pl
from jax.experimental.pallas import tpu as pltpu

_NEG = -1e30     # "no edge" sentinel baked into the dense score matrix
_VALID = -1e29   # rows whose max score is below this have no incoming edges


def plp_conv_kernel(s_ref, x_ref, rst_ref, lse_ref):
    """Per-dst-row masked softmax + attention-weighted aggregation (one row tile)."""
    s = s_ref[...].astype(jnp.float32)               # (TM, N_src); bf16 stream, f32 math
    row_max = jnp.max(s, axis=-1, keepdims=True)     # (TM, 1)
    valid = row_max > _VALID                         # dst node has >= 1 incoming edge
    ex = jnp.exp(s - row_max)                        # non-edge entries underflow to 0
    denom = jnp.sum(ex, axis=-1, keepdims=True)      # (TM, 1); >= 1 for valid rows
    inv = pl.reciprocal(denom, approx=True)          # EUP vrcp, only TM elements

    lse_ref[...] = row_max + jnp.log(denom)          # single per-row stat for edge gather

    # update_all(u_mul_e('ft','a','m'), sum('m','ft'))  ==  A @ X  on the dense form.
    # Deferred normalisation: matmul the UNnormalised exponentials (bf16 MXU
    # operands, f32 accumulate), then scale by the (TM, 1) reciprocal.
    agg = jnp.dot(ex.astype(jnp.bfloat16), x_ref[...],
                  preferred_element_type=jnp.float32)
    rst_ref[...] = jnp.maximum(agg * jnp.where(valid, inv, 0.0), 0.0)  # activation = ReLU


def _round_up(x, m):
    return ((x + m - 1) // m) * m


def _vmem_capacity_bytes():
    """Generation-aware VMEM capacity; conservative 64 MiB (v7x) fallback."""
    try:
        return int(pltpu.get_tpu_info().vmem_capacity_bytes)
    except Exception:
        return 64 * 1024 * 1024


def _pick_row_tile(n_dst, n_src, c_pad, vmem_cap):
    """Largest row tile (multiple of 16, bf16 sublane packing) fitting the VMEM budget."""
    budget = int(vmem_cap * 0.65)                    # ~83 MiB on 128 MiB parts, ~41 MiB on v7x
    resident = 2 * n_src * c_pad                     # bf16 soft_label, single-buffered
    avail = max(budget - resident, 8 * 1024)
    # Per row: double-buffered bf16 score tile in (2*2*n_src) + f32 upcast /
    # exp / bf16 matmul-operand temporaries (~10*n_src) + double-buffered f32
    # rst out (2*4*c_pad) + lse out.
    per_row = 14 * n_src + 8 * c_pad + 8
    tm = avail // per_row
    tm = min(tm, 2048)                               # diminishing returns past ~2k rows
    tm = max((tm // 16) * 16, 16)
    tm = min(tm, _round_up(n_dst, 16))
    if n_dst > 16:
        # keep >= 2 grid steps so v7x's two TensorCores both get work
        tm = min(tm, _round_up(-(-n_dst // 2), 16))
    return int(tm)


def plp_conv_dense(scores_bf16, x_bf16, tm, vmem_limit):
    """scores_bf16: (n_pad, n_src) bf16 with -1e30 in non-edge slots (n_pad % tm == 0).
    x_bf16: (n_src, c_pad) bf16 resident soft labels.
    Returns rst (n_pad, c_pad) f32 and lse (n_pad, 1) f32."""
    n_pad, n_src = scores_bf16.shape
    c_pad = x_bf16.shape[1]
    grid = (n_pad // tm,)

    def build(resident_single_buffered):
        if resident_single_buffered:
            x_spec = pl.BlockSpec((n_src, c_pad), lambda i: (0, 0),
                                  pipeline_mode=pl.Buffered(1))
        else:
            x_spec = pl.BlockSpec((n_src, c_pad), lambda i: (0, 0))
        return pl.pallas_call(
            plp_conv_kernel,
            out_shape=(
                jax.ShapeDtypeStruct((n_pad, c_pad), jnp.float32),
                jax.ShapeDtypeStruct((n_pad, 1), jnp.float32),
            ),
            grid=grid,
            in_specs=[
                pl.BlockSpec((tm, n_src), lambda i: (i, 0)),   # streamed bf16 dst-row tiles
                x_spec,                                        # resident bf16 soft_label
            ],
            out_specs=(
                pl.BlockSpec((tm, c_pad), lambda i: (i, 0)),   # lane-dense rst
                pl.BlockSpec((tm, 1), lambda i: (i, 0)),       # per-row logsumexp
            ),
            compiler_params=pltpu.CompilerParams(
                dimension_semantics=("parallel",),             # v7x: 2 TCs split the rows
                vmem_limit_bytes=int(vmem_limit),
            ),
        )

    try:
        rst, lse = build(True)(scores_bf16, x_bf16)
    except Exception:
        # TODO(synk): pl.Buffered(1) not accepted on this JAX build -> default 2 buffers.
        rst, lse = build(False)(scores_bf16, x_bf16)
    return rst, lse


def plp_conv_forward(e_param, src, dst, soft_label, n_nodes):
    """PLPConv.forward: returns (rst, att) like the PyTorch module (eval mode)."""
    n_src = n_nodes
    c = soft_label.shape[1]
    c_pad = _round_up(max(c, 128), 128)              # lane-dense rst stores

    vmem_cap = _vmem_capacity_bytes()
    tm = _pick_row_tile(n_nodes, n_src, c_pad, vmem_cap)
    n_pad = _round_up(n_nodes, tm)
    vmem_limit = min(int(vmem_cap * 0.85), vmem_cap - 8 * 1024 * 1024)

    # Densify edge scores DIRECTLY at the padded size S[dst, src] (single scatter,
    # no second full-size pad copy); non-edges carry -1e30 so the kernel needs no
    # separate mask stream.  Streamed as bf16 to halve the dominant HBM traffic.
    # NOTE: duplicate (u, v) edges collapse (last write wins) -- dense-form caveat
    # vs. DGL edge_softmax on multigraphs.
    e_q = e_param[:, 0].astype(jnp.bfloat16)
    scores = jnp.full((n_pad, n_src), _NEG, jnp.bfloat16).at[dst, src].set(e_q)

    x = jnp.zeros((n_src, c_pad), jnp.bfloat16).at[:, :c].set(
        soft_label.astype(jnp.bfloat16))

    rst_pad, lse_pad = plp_conv_dense(scores, x, tm, vmem_limit)

    rst = rst_pad[:n_nodes, :c]
    lse = lse_pad[:n_nodes, 0]

    # Per-edge attention from the per-row logsumexp: O(E) work, no dense (N, N)
    # attention writeback from the kernel.  Use the bf16-quantized scores the
    # kernel saw so numerator and denominator stay consistent (rows sum to 1).
    att = jnp.exp(e_q.astype(jnp.float32) - lse[dst])
    # TODO(synk): attn_drop (nn.Dropout) skipped -- eval-mode / p = 0 behaviour.
    return rst, att


def reference(scores_dense, mask_dense, soft_label):
    """Pure-JAX f32 dense reference for the module forward."""
    s = jnp.where(mask_dense > 0, scores_dense, -1e30)
    ex = jnp.exp(s - jnp.max(s, axis=-1, keepdims=True)) * mask_dense
    denom = jnp.sum(ex, axis=-1, keepdims=True)
    denom = jnp.where(denom == 0.0, 1.0, denom)
    a = ex / denom
    rst = jnp.maximum(
        jnp.dot(a, soft_label, precision=jax.lax.Precision.HIGHEST,
                preferred_element_type=jnp.float32),
        0.0)
    return rst, a


if __name__ == "__main__":
    # --- small deterministic synthetic graph -------------------------------
    N = 48          # nodes (forces a padded, multi-step grid: tm=32, n_pad=64)
    C = 8           # number of classes in the soft label
    # edges: self loop + ring successor  -> every dst has in-degree 2
    src = np.concatenate([np.arange(N), np.arange(N)])
    dst = np.concatenate([np.arange(N), (np.arange(N) + 1) % N])
    E = src.shape[0]

    key = jax.random.PRNGKey(0)
    k_e, k_lab = jax.random.split(key)

    # parameter init matching the module: uniform(-stdv, stdv), stdv=sqrt(6/(E+1))
    stdv = math.sqrt(6.0 / (E + 1))
    e_param = jax.random.uniform(k_e, (E, 1), jnp.float32, minval=-stdv, maxval=stdv)

    # soft labels (row-stochastic, like softmax outputs)
    soft_label = jax.nn.softmax(jax.random.normal(k_lab, (N, C), jnp.float32), axis=-1)

    src_j = jnp.asarray(src, jnp.int32)
    dst_j = jnp.asarray(dst, jnp.int32)

    rst, att = plp_conv_forward(e_param, src_j, dst_j, soft_label, N)
    rst = jax.block_until_ready(rst)
    att = jax.block_until_ready(att)

    # sanity check against a pure-JAX f32 dense reference (tolerance relaxed for
    # the bf16 score stream / bf16 MXU operands / approx reciprocal)
    scores_dense = jnp.zeros((N, N), jnp.float32).at[dst_j, src_j].set(e_param[:, 0])
    mask_dense = jnp.zeros((N, N), jnp.float32).at[dst_j, src_j].set(1.0)
    rst_ref, a_ref = reference(scores_dense, mask_dense, soft_label)

    np.testing.assert_allclose(np.asarray(rst), np.asarray(rst_ref), rtol=2e-2, atol=2e-2)
    np.testing.assert_allclose(np.asarray(att), np.asarray(a_ref[dst_j, src_j]),
                               rtol=2e-2, atol=2e-2)
    assert rst.shape == (N, C) and att.shape == (E,)

    print("KERNEL_OK")
</pallas_src>

<mosaic_0001>
module attributes {stable_mosaic.version = 11 : i64} {
  func.func @plp_conv_kernel(%arg0: i32, %arg1: memref<32x48xbf16, #tpu.memory_space<vmem>>, %arg2: memref<48x128xbf16, #tpu.memory_space<vmem>>, %arg3: memref<32x128xf32, #tpu.memory_space<vmem>>, %arg4: memref<32x1xf32, #tpu.memory_space<vmem>>) attributes {dimension_semantics = [#tpu.dimension_semantics<parallel>], iteration_bounds = array<i64: 2>, scalar_prefetch = 0 : i64, scratch_operands = 0 : i64, tpu.core_type = #tpu.core_type<tc>, window_params = [{transform_indices = @transform_0, window_bounds = array<i64: 32, 48>}, {pipeline_mode = #tpu.pipeline_mode<synchronous>, transform_indices = @transform_1, window_bounds = array<i64: 48, 128>}, {transform_indices = @transform_2, window_bounds = array<i64: 32, 128>}, {transform_indices = @transform_3, window_bounds = array<i64: 32, 1>}]} {
    %c0 = arith.constant 0 : index
    %c0_0 = arith.constant 0 : index
    %0 = vector.load %arg1[%c0, %c0_0] : memref<32x48xbf16, #tpu.memory_space<vmem>>, vector<32x48xbf16>
    %1 = arith.extf %0 : vector<32x48xbf16> to vector<32x48xf32>
    %cst = arith.constant dense<0xFF800000> : vector<32xf32>
    %2 = vector.multi_reduction <maximumf>, %1, %cst [1] : vector<32x48xf32> to vector<32xf32>
    %3 = vector.shape_cast %2 : vector<32xf32> to vector<32x1xf32>
    %cst_1 = arith.constant -1.000000e+29 : f32
    %4 = vector.broadcast %cst_1 : f32 to vector<32x1xf32>
    %5 = arith.cmpf ogt, %3, %4 : vector<32x1xf32>
    %6 = vector.broadcast %3 : vector<32x1xf32> to vector<32x48xf32>
    %7 = arith.subf %1, %6 : vector<32x48xf32>
    %8 = math.exp %7 : vector<32x48xf32>
    %cst_2 = arith.constant dense<0.000000e+00> : vector<32xf32>
    %9 = vector.multi_reduction <add>, %8, %cst_2 [1] : vector<32x48xf32> to vector<32xf32>
    %10 = vector.shape_cast %9 : vector<32xf32> to vector<32x1xf32>
    %11 = tpu.reciprocal %10 {approx = true} : vector<32x1xf32> -> vector<32x1xf32>
    %12 = math.log %10 : vector<32x1xf32>
    %13 = arith.addf %3, %12 : vector<32x1xf32>
    %c0_3 = arith.constant 0 : index
    %c0_4 = arith.constant 0 : index
    %14 = vector.load %arg4[%c0_3, %c0_4] : memref<32x1xf32, #tpu.memory_space<vmem>>, vector<32x1xf32>
    tpu.vector_store %arg4[%c0_3, %c0_4], %13 {strides = array<i32>} : memref<32x1xf32, #tpu.memory_space<vmem>>, vector<32x1xf32>,
    %15 = arith.truncf %8 : vector<32x48xf32> to vector<32x48xbf16>
    %c0_5 = arith.constant 0 : index
    %c0_6 = arith.constant 0 : index
    %16 = vector.load %arg2[%c0_5, %c0_6] : memref<48x128xbf16, #tpu.memory_space<vmem>>, vector<48x128xbf16>
    %cst_7 = arith.constant dense<0.000000e+00> : vector<32x128xf32>
    %17 = tpu.matmul %15, %16, %cst_7 {dimension_numbers = #tpu.dot_dimension_numbers<[1], [0], [0], [1], [0, 0, 1, 1], [], []>} : vector<32x48xbf16>, vector<48x128xbf16>, vector<32x128xf32> -> vector<32x128xf32>
    %cst_8 = arith.constant 0.000000e+00 : f32
    %18 = vector.broadcast %cst_8 : f32 to vector<32x1xf32>
    %19 = arith.select %5, %11, %18 : vector<32x1xi1>, vector<32x1xf32>
    %20 = vector.broadcast %19 : vector<32x1xf32> to vector<32x128xf32>
    %21 = arith.mulf %17, %20 : vector<32x128xf32>
    %cst_9 = arith.constant 0.000000e+00 : f32
    %22 = vector.broadcast %cst_9 : f32 to vector<32x128xf32>
    %23 = arith.maximumf %21, %22 : vector<32x128xf32>
    %c0_10 = arith.constant 0 : index
    %c0_11 = arith.constant 0 : index
    %24 = vector.load %arg3[%c0_10, %c0_11] : memref<32x128xf32, #tpu.memory_space<vmem>>, vector<32x128xf32>
    tpu.vector_store %arg3[%c0_10, %c0_11], %23 {strides = array<i32>} : memref<32x128xf32, #tpu.memory_space<vmem>>, vector<32x128xf32>,
    return
  }
  func.func @transform_0(%arg0: i32) -> (i32, i32) {
    %c0_i32 = arith.constant 0 : i32
    %c0_i32_0 = arith.constant 0 : i32
    return %arg0, %c0_i32 : i32, i32
  }
  func.func @transform_1(%arg0: i32) -> (i32, i32) {
    %c0_i32 = arith.constant 0 : i32
    %c0_i32_0 = arith.constant 0 : i32
    %c0_i32_1 = arith.constant 0 : i32
    return %c0_i32, %c0_i32_0 : i32, i32
  }
  func.func @transform_2(%arg0: i32) -> (i32, i32) {
    %c0_i32 = arith.constant 0 : i32
    %c0_i32_0 = arith.constant 0 : i32
    return %arg0, %c0_i32 : i32, i32
  }
  func.func @transform_3(%arg0: i32) -> (i32, i32) {
    %c0_i32 = arith.constant 0 : i32
    %c0_i32_0 = arith.constant 0 : i32
    return %arg0, %c0_i32 : i32, i32
  }
}

module attributes {stable_mosaic.version = 11 : i64} {
  func.func @plp_conv_kernel(%arg0: i32, %arg1: memref<32x48xbf16, #tpu.memory_space<vmem>>, %arg2: memref<48x128xbf16, #tpu.memory_space<vmem>>, %arg3: memref<32x128xf32, #tpu.memory_space<vmem>>, %arg4: memref<32x1xf32, #tpu.memory_space<vmem>>) attributes {dimension_semantics = [#tpu.dimension_semantics<parallel>], iteration_bounds = array<i64: 2>, scalar_prefetch = 0 : i64, scratch_operands = 0 : i64, tpu.core_type = #tpu.core_type<tc>, window_params = [{transform_indices = @transform_0, window_bounds = array<i64: 32, 48>}, {pipeline_mode = #tpu.pipeline_mode<synchronous>, transform_indices = @transform_1, window_bounds = array<i64: 48, 128>}, {transform_indices = @transform_2, window_bounds = array<i64: 32, 128>}, {transform_indices = @transform_3, window_bounds = array<i64: 32, 1>}]} {
    %c0 = arith.constant 0 : index
    %c0_0 = arith.constant 0 : index
    %0 = vector.load %arg1[%c0, %c0_0] : memref<32x48xbf16, #tpu.memory_space<vmem>>, vector<32x48xbf16>
    %1 = arith.extf %0 : vector<32x48xbf16> to vector<32x48xf32>
    %cst = arith.constant dense<0xFF800000> : vector<32xf32>
    %2 = vector.multi_reduction <maximumf>, %1, %cst [1] : vector<32x48xf32> to vector<32xf32>
    %3 = vector.shape_cast %2 : vector<32xf32> to vector<32x1xf32>
    %cst_1 = arith.constant -1.000000e+29 : f32
    %4 = vector.broadcast %cst_1 : f32 to vector<32x1xf32>
    %5 = arith.cmpf ogt, %3, %4 : vector<32x1xf32>
    %6 = vector.broadcast %3 : vector<32x1xf32> to vector<32x48xf32>
    %7 = arith.subf %1, %6 : vector<32x48xf32>
    %8 = math.exp %7 : vector<32x48xf32>
    %cst_2 = arith.constant dense<0.000000e+00> : vector<32xf32>
    %9 = vector.multi_reduction <add>, %8, %cst_2 [1] : vector<32x48xf32> to vector<32xf32>
    %10 = vector.shape_cast %9 : vector<32xf32> to vector<32x1xf32>
    %11 = tpu.reciprocal %10 {approx = true} : vector<32x1xf32> -> vector<32x1xf32>
    %12 = math.log %10 : vector<32x1xf32>
    %13 = arith.addf %3, %12 : vector<32x1xf32>
    %c0_3 = arith.constant 0 : index
    %c0_4 = arith.constant 0 : index
    %14 = vector.load %arg4[%c0_3, %c0_4] : memref<32x1xf32, #tpu.memory_space<vmem>>, vector<32x1xf32>
    tpu.vector_store %arg4[%c0_3, %c0_4], %13 {strides = array<i32>} : memref<32x1xf32, #tpu.memory_space<vmem>>, vector<32x1xf32>,
    %15 = arith.truncf %8 : vector<32x48xf32> to vector<32x48xbf16>
    %c0_5 = arith.constant 0 : index
    %c0_6 = arith.constant 0 : index
    %16 = vector.load %arg2[%c0_5, %c0_6] : memref<48x128xbf16, #tpu.memory_space<vmem>>, vector<48x128xbf16>
    %cst_7 = arith.constant dense<0.000000e+00> : vector<32x128xf32>
    %17 = tpu.matmul %15, %16, %cst_7 {dimension_numbers = #tpu.dot_dimension_numbers<[1], [0], [0], [1], [0, 0, 1, 1], [], []>} : vector<32x48xbf16>, vector<48x128xbf16>, vector<32x128xf32> -> vector<32x128xf32>
    %cst_8 = arith.constant 0.000000e+00 : f32
    %18 = vector.broadcast %cst_8 : f32 to vector<32x1xf32>
    %19 = arith.select %5, %11, %18 : vector<32x1xi1>, vector<32x1xf32>
    %20 = vector.broadcast %19 : vector<32x1xf32> to vector<32x128xf32>
    %21 = arith.mulf %17, %20 : vector<32x128xf32>
    %cst_9 = arith.constant 0.000000e+00 : f32
    %22 = vector.broadcast %cst_9 : f32 to vector<32x128xf32>
    %23 = arith.maximumf %21, %22 : vector<32x128xf32>
    %c0_10 = arith.constant 0 : index
    %c0_11 = arith.constant 0 : index
    %24 = vector.load %arg3[%c0_10, %c0_11] : memref<32x128xf32, #tpu.memory_space<vmem>>, vector<32x128xf32>
    tpu.vector_store %arg3[%c0_10, %c0_11], %23 {strides = array<i32>} : memref<32x128xf32, #tpu.memory_space<vmem>>, vector<32x128xf32>,
    return
  }
  func.func @transform_0(%arg0: i32) -> (i32, i32) {
    %c0_i32 = arith.constant 0 : i32
    %c0_i32_0 = arith.constant 0 : i32
    return %arg0, %c0_i32 : i32, i32
  }
  func.func @transform_1(%arg0: i32) -> (i32, i32) {
    %c0_i32 = arith.constant 0 : i32
    %c0_i32_0 = arith.constant 0 : i32
    %c0_i32_1 = arith.constant 0 : i32
    return %c0_i32, %c0_i32_0 : i32, i32
  }
  func.func @transform_2(%arg0: i32) -> (i32, i32) {
    %c0_i32 = arith.constant 0 : i32
    %c0_i32_0 = arith.constant 0 : i32
    return %arg0, %c0_i32 : i32, i32
  }
  func.func @transform_3(%arg0: i32) -> (i32, i32) {
    %c0_i32 = arith.constant 0 : i32
    %c0_i32_0 = arith.constant 0 : i32
    return %arg0, %c0_i32 : i32, i32
  }
}

</mosaic_0001>

<llo_original>
// kernel: tpu_custom_call.1
$region0: #{tpu_custom_call.1}
  #allocation0 [shape = 'u32[]', space=smem, size = 0x4, offset = 0x4, fixed_abs, tag = 'smem constant byte address 0x4 - core index']
  #allocation1 [shape = 'u32[144,128]{1,0:T(1,128)}', space=vmem, size = 0x12000, scoped, tag = 'internal scratch']
  %s0 = inlined_call_operand.vmem [shape: bf16[64,48], index: 0, kind: input, shape index: {}]
  %s1 = inlined_call_operand.vmem [shape: bf16[48,128], index: 1, kind: input, shape index: {}]
  %s2 = inlined_call_operand.hbm [shape: f32[64,128], index: 2, kind: output, shape index: {0}]
  %s3 = inlined_call_operand.vmem [shape: f32[64,1], index: 3, kind: output, shape index: {1}]
  %4 = xla_tuple %s2, %s3
  %s5 = sld [smem:[#allocation0]]
  $region49: #{tpu_custom_call.1} parent=0
    _
  %s7 = ssub.s32 1, %s5
  %s8 = scalar_select 0, %s7, %s5
  $region1: #{tpu_custom_call.1} parent=0
    #allocation2 [shape = 'u8[32768]{0}', space=vmem, size = 0x8000, scoped, tag = 'output window, operand 0']
    #allocation3 [shape = 's32[2]{0}', space=sflag, size = 0x8, scoped, tag = 'scoped memory for tpu_custom_call.1']
    %9 = vsyncpa [#allocation3], 0
    %s10 = scalar_lea.sflag [#allocation3], 1
    %11 = vsyncpa %s10, 0
    loop: start=0, step=1, limit=4
    $region2: #{tpu_custom_call.1} parent=1 // loop_pre_header
      _
    $region3: #{tpu_custom_call.1} parent=1 // loop_header
      %s13 = sphi 0, %s17
      %p14 = scmp.ge.s32.totalorder %s13, 4
      %s23 = sphi 0, %s25
      %s26 = sphi 0, %s23
      %s27 = sphi 0, %s26
      %s43 = sphi 0, %s27
      %s47 = sphi 0, %s47
      %s49 = sphi 0, %s47
      %s50 = sphi 0, %s49
      %s64 = sphi 0, %s50
      %s70 = sphi 0, %s72
      %s73 = sphi 0, %s70
      %s74 = sphi 0, %s73
      %s90 = sphi 0, %s74
      %s96 = sphi 0, %s98
      %s99 = sphi 0, %s96
      %s100 = sphi 0, %s99
      %s116 = sphi 0, %s100
    $region4: #{tpu_custom_call.1} parent=1 // loop_header_branch
      %16 = sbr.rel (%p14) target = $region8
    $region5: #{tpu_custom_call.1} parent=1 // loop_body
      %s18 = ssub.s32 %s13, 1
      %s19 = ssub.s32 %s13, 2
      %s20 = sadd.s32 %s13, 1
      %s21 = ssub.s32 %s13, %s20
      %p22 = scmp.eq.s32.totalorder %s21, 0
      %s24 = sadd.s32 %s23, 1
      %s25 = scalar_select %p22, %s23, %s24
      %p28 = pneg %p22
      %p29 = scmp.eq.s32.totalorder %s13, 1
      %p30 = por %p28, %p29
      %p31 = scmp.ne.s32.totalorder %s23, %s26
      %p32 = scmp.eq.s32.totalorder %s13, 0
      %p33 = por %p31, %p32
      %p34 = scmp.ne.s32.totalorder %s23, %s26
      %p35 = scmp.eq.s32.totalorder %s18, 1
      %p36 = por %p34, %p35
      %p37 = scmp.ne.s32.totalorder %s26, %s27
      %p38 = scmp.eq.s32.totalorder %s18, 0
      %p39 = por %p37, %p38
      %p40 = scmp.ne.s32.totalorder %s26, %s27
      %p41 = scmp.eq.s32.totalorder %s19, 1
      %p42 = por %p40, %p41
      %p44 = scmp.ne.s32.totalorder %s27, %s43
      %p45 = scmp.eq.s32.totalorder %s19, 0
      %p46 = por %p44, %p45
      %s48 = sadd.s32 %s47, 1
      %p51 = scmp.eq.s32.totalorder %s13, 1
      %p52 = scmp.ne.s32.totalorder %s47, %s49
      %p53 = scmp.eq.s32.totalorder %s13, 0
      %p54 = por %p52, %p53
      %p55 = scmp.ne.s32.totalorder %s47, %s49
      %p56 = scmp.eq.s32.totalorder %s18, 1
      %p57 = por %p55, %p56
      %p58 = scmp.ne.s32.totalorder %s49, %s50
      %p59 = scmp.eq.s32.totalorder %s18, 0
      %p60 = por %p58, %p59
      %p61 = scmp.ne.s32.totalorder %s49, %s50
      %p62 = scmp.eq.s32.totalorder %s19, 1
      %p63 = por %p61, %p62
      %p65 = scmp.ne.s32.totalorder %s50, %s64
      %p66 = scmp.eq.s32.totalorder %s19, 0
      %p67 = por %p65, %p66
      %s68 = ssub.s32 %s13, %s20
      %p69 = scmp.eq.s32.totalorder %s68, 0
      %s71 = sadd.s32 %s70, 1
      %s72 = scalar_select %p69, %s70, %s71
      %p75 = pneg %p69
      %p76 = scmp.eq.s32.totalorder %s13, 1
      %p77 = por %p75, %p76
      %p78 = scmp.ne.s32.totalorder %s70, %s73
      %p79 = scmp.eq.s32.totalorder %s13, 0
      %p80 = por %p78, %p79
      %p81 = scmp.ne.s32.totalorder %s70, %s73
      %p82 = scmp.eq.s32.totalorder %s18, 1
      %p83 = por %p81, %p82
      %p84 = scmp.ne.s32.totalorder %s73, %s74
      %p85 = scmp.eq.s32.totalorder %s18, 0
      %p86 = por %p84, %p85
      %p87 = scmp.ne.s32.totalorder %s73, %s74
      %p88 = scmp.eq.s32.totalorder %s19, 1
      %p89 = por %p87, %p88
      %p91 = scmp.ne.s32.totalorder %s74, %s90
      %p92 = scmp.eq.s32.totalorder %s19, 0
      %p93 = por %p91, %p92
      %s94 = ssub.s32 %s13, %s20
      %p95 = scmp.eq.s32.totalorder %s94, 0
      %s97 = sadd.s32 %s96, 1
      %s98 = scalar_select %p95, %s96, %s97
      %p101 = pneg %p95
      %p102 = scmp.eq.s32.totalorder %s13, 1
      %p103 = por %p101, %p102
      %p104 = scmp.ne.s32.totalorder %s96, %s99
      %p105 = scmp.eq.s32.totalorder %s13, 0
      %p106 = por %p104, %p105
      %p107 = scmp.ne.s32.totalorder %s96, %s99
      %p108 = scmp.eq.s32.totalorder %s18, 1
      %p109 = por %p107, %p108
      %p110 = scmp.ne.s32.totalorder %s99, %s100
      %p111 = scmp.eq.s32.totalorder %s18, 0
      %p112 = por %p110, %p111
      %p113 = scmp.ne.s32.totalorder %s99, %s100
      %p114 = scmp.eq.s32.totalorder %s19, 1
      %p115 = por %p113, %p114
      %p117 = scmp.ne.s32.totalorder %s100, %s116
      %p118 = scmp.eq.s32.totalorder %s19, 0
      %p119 = por %p117, %p118
      %p120 = scmp.le.s32.totalorder 1, %s13
      %p121 = scmp.lt.s32.totalorder %s13, 3
      %p122 = pnand %p120, %p121
      %p123 = pneg %p122
      // Predicated region
      $region9: #{tpu_custom_call.1} parent=5 // pred_check
        _
      $region10: #{tpu_custom_call.1} parent=5 // pred_check_branch
        %125 = sbr.rel (%p122) target = $region12
      $region11: #{tpu_custom_call.1} parent=5 // pred_region
        %s126 = ssub.s32 %s13, 1
        // Predicated region
        $region13: #{tpu_custom_call.1} parent=11 // pred_check
          %p127 = pneg %p60
        $region14: #{tpu_custom_call.1} parent=11 // pred_check_branch
          %129 = sbr.rel (%p127) target = $region16
        $region15: #{tpu_custom_call.1} parent=11 // pred_region
          _
        $region16: #{tpu_custom_call.1} parent=11 // pred_fallthru
          _
      $region12: #{tpu_custom_call.1} parent=5 // pred_fallthru
        _
      %p130 = scmp.lt.s32.totalorder %s13, 2
      // Predicated region
      $region17: #{tpu_custom_call.1} parent=5 // pred_check
        %p131 = pneg %p130
      $region18: #{tpu_custom_call.1} parent=5 // pred_check_branch
        %133 = sbr.rel (%p131) target = $region20
      $region19: #{tpu_custom_call.1} parent=5 // pred_region
        // Predicated region
        $region21: #{tpu_custom_call.1} parent=19 // pred_check
          %p134 = pneg %p33
        $region22: #{tpu_custom_call.1} parent=19 // pred_check_branch
          %136 = sbr.rel (%p134) target = $region24
        $region23: #{tpu_custom_call.1} parent=19 // pred_region
          %s137 = smul.u32 4, %s13
          %p138 = scmp.lt.s32.totalorder %s137, 7
          %s139 = scalar_select %p138, %s137, 7
          %s140 = smul.addr %s139, 4
          %s141 = scalar_lea.vmem %s0, %s140
          %s142 = smul.u32 4, %s13
        $region24: #{tpu_custom_call.1} parent=19 // pred_fallthru
          _
      $region20: #{tpu_custom_call.1} parent=5 // pred_fallthru
        _
      %p143 = scmp.le.s32.totalorder 1, %s13
      %p144 = scmp.lt.s32.totalorder %s13, 3
      %p145 = pnand %p143, %p144
      %p146 = pneg %p145
      // Predicated region
      $region25: #{tpu_custom_call.1} parent=5 // pred_check
        _
      $region26: #{tpu_custom_call.1} parent=5 // pred_check_branch
        %148 = sbr.rel (%p145) target = $region28
      $region27: #{tpu_custom_call.1} parent=5 // pred_region
        %s149 = ssub.s32 %s13, 1
        %s150 = smul.u32 4, %s18
        %p151 = scmp.lt.s32.totalorder %s150, 7
        %s152 = scalar_select %p151, %s150, 7
        %s153 = smul.addr %s152, 4
        %s154 = scalar_lea.vmem %s0, %s153
        %p155 = pneg %p39
        %p156 = pneg %p36
        %p157 = pneg %p60
        %p158 = pneg %p57
        %p159 = pneg %p86
        %p160 = pneg %p83
        %s161 = sand.u32 %s73, 1
        %s162 = scalar_lea.sflag [#allocation3], %s161
        %s163 = sand.u32 %s73, 1
        %s164 = smul.addr %s163, 32
        %s165 = scalar_lea.vmem [#allocation2], %s164
        %p166 = pneg %p112
        %p167 = pneg %p109
        %s168 = smul.u32 4, %s18
        %p169 = scmp.lt.s32.totalorder %s168, 7
        %s170 = scalar_select %p169, %s168, 7
        %s171 = smul.addr %s170, 8
        %s172 = scalar_lea.vmem %s3, %s171
        %s173 = smul.u32 4, %s18
        %p174 = scmp.lt.s32.totalorder %s173, 7
        %s175 = scalar_select %p174, %s173, 7
        %s176 = smul.addr %s175, 4
        %s177 = scalar_lea.vmem %s0, %s176
        %s178 = smul.u32 4, %s18
        %s179 = smul.u32 4, %s18
        %s180 = smul.u32 4, %s18
        %p181 = scmp.lt.s32.totalorder %s180, 7
        %s182 = scalar_select %p181, %s180, 7
        %s183 = smul.addr %s182, 8
        %s184 = scalar_lea.vmem %s3, %s183
        %s185 = smul.u32 4, %s18
        %v187 = vld [vmem:[%s177] sm:$0xf]
        %v188 = vld [vmem:[%s177 + $0x4] sm:$0xf]
        %v189 = vld [vmem:[%s177 + $0x8] sm:$0xf]
        %v190 = vld [vmem:[%s177 + $0xc] sm:$0xf]
        %v191 = vunpack.c.l.bf16 %v187
        %v192 = vunpack.c.l.bf16 %v188
        %v193 = vunpack.c.l.bf16 %v189
        %v194 = vunpack.c.l.bf16 %v190
        %vm195 = vcmask 392192
        %v196 = vsel %vm195, %v191, -inf
        %197 = vmax.xlane.f32.xlu0 %v196
        %v198 = vpop.xlane.xlu0 %197
        %v199 = vsel %vm195, %v192, -inf
        %200 = vmax.xlane.f32.xlu0 %v199
        %v201 = vpop.xlane.xlu0 %200
        %v202 = vsel %vm195, %v193, -inf
        %203 = vmax.xlane.f32.xlu0 %v202
        %v204 = vpop.xlane.xlu0 %203
        %v205 = vsel %vm195, %v194, -inf
        %206 = vmax.xlane.f32.xlu0 %v205
        %v207 = vpop.xlane.xlu0 %206
        %vm208 = vcmp.gt.f32.partialorder %v198, -1e+29
        %vm209 = vcmp.gt.f32.partialorder %v201, -1e+29
        %vm210 = vcmp.gt.f32.partialorder %v204, -1e+29
        %vm211 = vcmp.gt.f32.partialorder %v207, -1e+29
        %v212 = vsub.f32 %v191, %v198
        %v213 = vsub.f32 %v192, %v201
        %v214 = vsub.f32 %v193, %v204
        %v215 = vsub.f32 %v194, %v207
        %v216 = vmul.f32 %v212, 1.442695
        %v217 = vpow.pop %v216
        %v218 = vmul.f32 %v213, 1.442695
        %v219 = vpow.pop %v218
        %v220 = vmul.f32 %v214, 1.442695
        %v221 = vpow.pop %v220
        %v222 = vmul.f32 %v215, 1.442695
        %v223 = vpow.pop %v222
        %v224 = vsel %vm195, %v217, 0.0
        %225 = vadd.xlane.f32.xlu0 %v224
        %v226 = vpop.xlane.xlu0 %225
        %v227 = vsel %vm195, %v219, 0.0
        %228 = vadd.xlane.f32.xlu0 %v227
        %v229 = vpop.xlane.xlu0 %228
        %v230 = vsel %vm195, %v221, 0.0
        %231 = vadd.xlane.f32.xlu0 %v230
        %v232 = vpop.xlane.xlu0 %231
        %v233 = vsel %vm195, %v223, 0.0
        %234 = vadd.xlane.f32.xlu0 %v233
        %v235 = vpop.xlane.xlu0 %234
        %v236 = vrcp.pop %v226
        %v237 = vrcp.pop %v229
        %v238 = vrcp.pop %v232
        %v239 = vrcp.pop %v235
        %v240 = vlog2.pop %v226
        %v241 = vmul.f32 %v240, 0.6931472
        %v242 = vlog2.pop %v229
        %v243 = vmul.f32 %v242, 0.6931472
        %v244 = vlog2.pop %v232
        %v245 = vmul.f32 %v244, 0.6931472
        %v246 = vlog2.pop %v235
        %v247 = vmul.f32 %v246, 0.6931472
        %v248 = vadd.f32 %v198, %v241
        %v249 = vadd.f32 %v201, %v243
        %v250 = vadd.f32 %v204, %v245
        %v251 = vadd.f32 %v207, %v247
        %vm252 = vcmask 7168
        %253 = vst.msk [vmem:[%s184] sm:$0xff] %vm252, %v248
        %254 = vst.msk [vmem:[%s184 + $0x8] sm:$0xff] %vm252, %v249
        %255 = vst.msk [vmem:[%s184 + $0x10] sm:$0xff] %vm252, %v250
        %256 = vst.msk [vmem:[%s184 + $0x18] sm:$0xff] %vm252, %v251
        %v257 = vpack.c.bf16 %v219, %v217
        %v258 = vpack.c.bf16 %v223, %v221
        %v259 = vld [vmem:[%s1] sm:$0xf]
        %v260 = vld [vmem:[%s1 + $0x4] sm:$0xf]
        %v261 = vld [vmem:[%s1 + $0x8] sm:$0xf]
        %v262 = vld [vmem:[%s1 + $0xc] sm:$0xf]
        %v263 = vld [vmem:[%s1 + $0x10] sm:$0xf]
        %v264 = vld [vmem:[%s1 + $0x14] sm:$0xf]
        %v271 = vunpack.c.l.b16 %v259
        %v272 = vunpack.c.l.b16 %v260
        %v273 = vunpack.c.l.b16 %v261
        %v274 = vunpack.c.l.b16 %v262
        %v275 = vunpack.c.l.b16 %v263
        %v276 = vunpack.c.l.b16 %v264
        %v277 = vpack.c.b16 %v272, %v271
        %v278 = vpack.c.b16 %v274, %v273
        %v279 = vpack.c.b16 %v276, %v275
        %v284 = vsel %vm195, %v257, 0
        %v287 = vsel %vm195, %v258, 0
        %289 = vmatprep.subr.bf16.mxu0 0
        %290 = vmatpush1.bf16.msra.mxu0 %v277
        %291 = vmatprep.subr.bf16.mxu0 0
        %292 = vmatpush1.bf16.msra.mxu0 %v278
        %293 = vmatprep.subr.bf16.mxu0 0
        %294 = vmatpush1.bf16.msra.mxu0 %v279
        %295 = vmatprep.subr.bf16.mxu0 0
        %296 = vmatpush1.bf16.msra.mxu0 0
        %297 = vmatprep.subr.bf16.mxu0 0
        %298 = vmatpush1.bf16.msra.mxu0 0
        %299 = vmatprep.subr.bf16.mxu0 0
        %300 = vmatpush1.bf16.msra.mxu0 0
        %301 = vmatprep.subr.bf16.mxu0 0
        %302 = vmatpush1.bf16.msra.mxu0 0
        %303 = vmatprep.subr.bf16.mxu0 0
        %304 = vmatpush1.bf16.msra.mxu0 0
        %305 = vmatprep.subr.bf16.mxu0 0
        %306 = vmatpush1.bf16.msra.mxu0 0
        %307 = vmatprep.subr.bf16.mxu0 0
        %308 = vmatpush1.bf16.msra.mxu0 0
        %309 = vmatprep.subr.bf16.mxu0 0
        %310 = vmatpush1.bf16.msra.mxu0 0
        %311 = vmatprep.subr.bf16.mxu0 0
        %312 = vmatpush1.bf16.msra.mxu0 0
        %313 = vmatprep.subr.bf16.mxu0 0
        %314 = vmatpush1.bf16.msra.mxu0 0
        %315 = vmatprep.subr.bf16.mxu0 0
        %316 = vmatpush1.bf16.msra.mxu0 0
        %317 = vmatprep.subr.bf16.mxu0 0
        %318 = vmatpush1.bf16.msra.mxu0 0
        %319 = vmatprep.subr.bf16.mxu0 0
        %320 = vmatpush1.bf16.msra.mxu0 0
        %321 = vmatprep.mubr.bf16.mxu0 0
        %322 = vmatmul.mubr.bf16.gmra.mrb[0].mxu0 %v284
        %v323 = vpop.f32.mrb[0].mxu0
        %v324 = vadd.f32 0.0, %v323
        %v325 = vpop.f32.mrb[0].mxu0
        %v326 = vpop.f32.mrb[0].mxu0
        %v327 = vadd.f32 0.0, %v326
        %v328 = vpop.f32.mrb[0].mxu0
        %329 = vmatprep.mubr.bf16.mxu0 0
        %330 = vmatmul.mubr.bf16.gmra.mrb[0].mxu0 %v287
        %v331 = vpop.f32.mrb[0].mxu0
        %v332 = vadd.f32 0.0, %v331
        %v333 = vpop.f32.mrb[0].mxu0
        %v334 = vpop.f32.mrb[0].mxu0
        %v335 = vadd.f32 0.0, %v334
        %v336 = vpop.f32.mrb[0].mxu0
        %337 = vdwg.mxu0
        %v338 = vsel %vm208, %v236, 0.0
        %v339 = vsel %vm209, %v237, 0.0
        %v340 = vsel %vm210, %v238, 0.0
        %v341 = vsel %vm211, %v239, 0.0
        %v342 = vmul.f32 %v324, %v338
        %v343 = vmul.f32 %v327, %v339
        %v344 = vmul.f32 %v332, %v340
        %v345 = vmul.f32 %v335, %v341
        %v346 = vmax.f32 %v342, 0.0
        %v347 = vmax.f32 %v343, 0.0
        %v348 = vmax.f32 %v344, 0.0
        %v349 = vmax.f32 %v345, 0.0
        %350 = vst [vmem:[%s165] sm:$0xff] %v346
        %351 = vst [vmem:[%s165 + $0x8] sm:$0xff] %v347
        %352 = vst [vmem:[%s165 + $0x10] sm:$0xff] %v348
        %353 = vst [vmem:[%s165 + $0x18] sm:$0xff] %v349
        %s354 = sand.u32 %s73, 1
        %s355 = scalar_lea.sflag [#allocation3], %s354
        %s356 = sand.u32 %s73, 1
        %s357 = smul.addr %s356, 32
        %s358 = scalar_lea.vmem [#allocation2], %s357
        %s359 = smul.u32 4, %s18
        %p360 = scmp.lt.s32.totalorder %s359, 7
        %s361 = scalar_select %p360, %s359, 7
        %s362 = smul.addr %s361, 8
        %s363 = scalar_lea.vmem %s3, %s362
        // Predicated region
        $region29: #{tpu_custom_call.1} parent=27 // pred_check
          %p364 = pneg %p83
        $region30: #{tpu_custom_call.1} parent=27 // pred_check_branch
          %366 = sbr.rel (%p364) target = $region32
        $region31: #{tpu_custom_call.1} parent=27 // pred_region
          %s367 = smul.u32 4, %s18
          %s369 = ssub.s32 512, 512
          %370 = vsyncadd %s355, %s369
          %s371 = smul.addr %s367, 128
          %s372 = scalar_lea.hbm %s2, %s371
          %s373 = sshll.u32 %s358, 4
          %s374 = int_to_ptr.vmem [resolvable:$true] %s373
          %379 = dma.vmem_to_hbm [thread:$0]  %s374, 512, %s372, %s355, 128, 128, 8
        $region32: #{tpu_custom_call.1} parent=27 // pred_fallthru
          _
        // Predicated region
        $region33: #{tpu_custom_call.1} parent=27 // pred_check
          %p380 = pneg %p109
        $region34: #{tpu_custom_call.1} parent=27 // pred_check_branch
          %382 = sbr.rel (%p380) target = $region36
        $region35: #{tpu_custom_call.1} parent=27 // pred_region
          %s383 = smul.u32 4, %s18
        $region36: #{tpu_custom_call.1} parent=27 // pred_fallthru
          _
      $region28: #{tpu_custom_call.1} parent=5 // pred_fallthru
        _
      %p384 = scmp.le.s32.totalorder 2, %s13
      // Predicated region
      $region37: #{tpu_custom_call.1} parent=5 // pred_check
        %p385 = pneg %p384
      $region38: #{tpu_custom_call.1} parent=5 // pred_check_branch
        %387 = sbr.rel (%p385) target = $region40
      $region39: #{tpu_custom_call.1} parent=5 // pred_region
        %s388 = ssub.s32 %s13, 2
        // Predicated region
        $region41: #{tpu_custom_call.1} parent=39 // pred_check
          %p389 = pneg %p89
        $region42: #{tpu_custom_call.1} parent=39 // pred_check_branch
          %391 = sbr.rel (%p389) target = $region44
        $region43: #{tpu_custom_call.1} parent=39 // pred_region
          %s392 = sand.u32 %s74, 1
          %s393 = scalar_lea.sflag [#allocation3], %s392
          %s394 = sand.u32 %s74, 1
          %s395 = smul.addr %s394, 32
          %s396 = scalar_lea.vmem [#allocation2], %s395
          %397 = dma.done %s393, 512
        $region44: #{tpu_custom_call.1} parent=39 // pred_fallthru
          _
        // Predicated region
        $region45: #{tpu_custom_call.1} parent=39 // pred_check
          %p398 = pneg %p115
        $region46: #{tpu_custom_call.1} parent=39 // pred_check_branch
          %400 = sbr.rel (%p398) target = $region48
        $region47: #{tpu_custom_call.1} parent=39 // pred_region
          %s401 = smul.u32 4, %s19
          %p402 = scmp.lt.s32.totalorder %s401, 7
          %s403 = scalar_select %p402, %s401, 7
          %s404 = smul.addr %s403, 8
          %s405 = scalar_lea.vmem %s3, %s404
        $region48: #{tpu_custom_call.1} parent=39 // pred_fallthru
          _
      $region40: #{tpu_custom_call.1} parent=5 // pred_fallthru
        _
    $region6: #{tpu_custom_call.1} parent=1 // loop_footer
      %s17 = sadd.s32 1, %s13
    $region7: #{tpu_custom_call.1} parent=1 // loop_footer_branch
      %12 = sbr.rel target = $region3
    $region8: #{tpu_custom_call.1} parent=1 // loop_exit
      _
    %406 = vsyncpa [#allocation3], 1
    %s407 = scalar_lea.sflag [#allocation3], 1
    %408 = vsyncpa %s407, 1

// kernel: tpu_custom_call.1
$region0: #{tpu_custom_call.1}
  #allocation0 [shape = 'u32[]', space=smem, size = 0x4, offset = 0x4, fixed_abs, tag = 'smem constant byte address 0x4 - core index']
  #allocation1 [shape = 'u32[144,128]{1,0:T(1,128)}', space=vmem, size = 0x12000, scoped, tag = 'internal scratch']
  %s0 = inlined_call_operand.vmem [shape: bf16[64,48], index: 0, kind: input, shape index: {}]
  %s1 = inlined_call_operand.vmem [shape: bf16[48,128], index: 1, kind: input, shape index: {}]
  %s2 = inlined_call_operand.hbm [shape: f32[64,128], index: 2, kind: output, shape index: {0}]
  %s3 = inlined_call_operand.vmem [shape: f32[64,1], index: 3, kind: output, shape index: {1}]
  %4 = xla_tuple %s2, %s3
  %s5 = sld [smem:[#allocation0]]
  $region49: #{tpu_custom_call.1} parent=0
    _
  %s7 = ssub.s32 1, %s5
  %s8 = scalar_select 0, %s7, %s5
  $region1: #{tpu_custom_call.1} parent=0
    #allocation2 [shape = 'u8[32768]{0}', space=vmem, size = 0x8000, scoped, tag = 'output window, operand 0']
    #allocation3 [shape = 's32[2]{0}', space=sflag, size = 0x8, scoped, tag = 'scoped memory for tpu_custom_call.1']
    %9 = vsyncpa [#allocation3], 0
    %s10 = scalar_lea.sflag [#allocation3], 1
    %11 = vsyncpa %s10, 0
    loop: start=0, step=1, limit=4
    $region2: #{tpu_custom_call.1} parent=1 // loop_pre_header
      _
    $region3: #{tpu_custom_call.1} parent=1 // loop_header
      %s13 = sphi 0, %s17
      %p14 = scmp.ge.s32.totalorder %s13, 4
      %s23 = sphi 0, %s25
      %s26 = sphi 0, %s23
      %s27 = sphi 0, %s26
      %s43 = sphi 0, %s27
      %s47 = sphi 0, %s47
      %s49 = sphi 0, %s47
      %s50 = sphi 0, %s49
      %s64 = sphi 0, %s50
      %s70 = sphi 0, %s72
      %s73 = sphi 0, %s70
      %s74 = sphi 0, %s73
      %s90 = sphi 0, %s74
      %s96 = sphi 0, %s98
      %s99 = sphi 0, %s96
      %s100 = sphi 0, %s99
      %s116 = sphi 0, %s100
    $region4: #{tpu_custom_call.1} parent=1 // loop_header_branch
      %16 = sbr.rel (%p14) target = $region8
    $region5: #{tpu_custom_call.1} parent=1 // loop_body
      %s18 = ssub.s32 %s13, 1
      %s19 = ssub.s32 %s13, 2
      %s20 = sadd.s32 %s13, 1
      %s21 = ssub.s32 %s13, %s20
      %p22 = scmp.eq.s32.totalorder %s21, 0
      %s24 = sadd.s32 %s23, 1
      %s25 = scalar_select %p22, %s23, %s24
      %p28 = pneg %p22
      %p29 = scmp.eq.s32.totalorder %s13, 1
      %p30 = por %p28, %p29
      %p31 = scmp.ne.s32.totalorder %s23, %s26
      %p32 = scmp.eq.s32.totalorder %s13, 0
      %p33 = por %p31, %p32
      %p34 = scmp.ne.s32.totalorder %s23, %s26
      %p35 = scmp.eq.s32.totalorder %s18, 1
      %p36 = por %p34, %p35
      %p37 = scmp.ne.s32.totalorder %s26, %s27
      %p38 = scmp.eq.s32.totalorder %s18, 0
      %p39 = por %p37, %p38
      %p40 = scmp.ne.s32.totalorder %s26, %s27
      %p41 = scmp.eq.s32.totalorder %s19, 1
      %p42 = por %p40, %p41
      %p44 = scmp.ne.s32.totalorder %s27, %s43
      %p45 = scmp.eq.s32.totalorder %s19, 0
      %p46 = por %p44, %p45
      %s48 = sadd.s32 %s47, 1
      %p51 = scmp.eq.s32.totalorder %s13, 1
      %p52 = scmp.ne.s32.totalorder %s47, %s49
      %p53 = scmp.eq.s32.totalorder %s13, 0
      %p54 = por %p52, %p53
      %p55 = scmp.ne.s32.totalorder %s47, %s49
      %p56 = scmp.eq.s32.totalorder %s18, 1
      %p57 = por %p55, %p56
      %p58 = scmp.ne.s32.totalorder %s49, %s50
      %p59 = scmp.eq.s32.totalorder %s18, 0
      %p60 = por %p58, %p59
      %p61 = scmp.ne.s32.totalorder %s49, %s50
      %p62 = scmp.eq.s32.totalorder %s19, 1
      %p63 = por %p61, %p62
      %p65 = scmp.ne.s32.totalorder %s50, %s64
      %p66 = scmp.eq.s32.totalorder %s19, 0
      %p67 = por %p65, %p66
      %s68 = ssub.s32 %s13, %s20
      %p69 = scmp.eq.s32.totalorder %s68, 0
      %s71 = sadd.s32 %s70, 1
      %s72 = scalar_select %p69, %s70, %s71
      %p75 = pneg %p69
      %p76 = scmp.eq.s32.totalorder %s13, 1
      %p77 = por %p75, %p76
      %p78 = scmp.ne.s32.totalorder %s70, %s73
      %p79 = scmp.eq.s32.totalorder %s13, 0
      %p80 = por %p78, %p79
      %p81 = scmp.ne.s32.totalorder %s70, %s73
      %p82 = scmp.eq.s32.totalorder %s18, 1
      %p83 = por %p81, %p82
      %p84 = scmp.ne.s32.totalorder %s73, %s74
      %p85 = scmp.eq.s32.totalorder %s18, 0
      %p86 = por %p84, %p85
      %p87 = scmp.ne.s32.totalorder %s73, %s74
      %p88 = scmp.eq.s32.totalorder %s19, 1
      %p89 = por %p87, %p88
      %p91 = scmp.ne.s32.totalorder %s74, %s90
      %p92 = scmp.eq.s32.totalorder %s19, 0
      %p93 = por %p91, %p92
      %s94 = ssub.s32 %s13, %s20
      %p95 = scmp.eq.s32.totalorder %s94, 0
      %s97 = sadd.s32 %s96, 1
      %s98 = scalar_select %p95, %s96, %s97
      %p101 = pneg %p95
      %p102 = scmp.eq.s32.totalorder %s13, 1
      %p103 = por %p101, %p102
      %p104 = scmp.ne.s32.totalorder %s96, %s99
      %p105 = scmp.eq.s32.totalorder %s13, 0
      %p106 = por %p104, %p105
      %p107 = scmp.ne.s32.totalorder %s96, %s99
      %p108 = scmp.eq.s32.totalorder %s18, 1
      %p109 = por %p107, %p108
      %p110 = scmp.ne.s32.totalorder %s99, %s100
      %p111 = scmp.eq.s32.totalorder %s18, 0
      %p112 = por %p110, %p111
      %p113 = scmp.ne.s32.totalorder %s99, %s100
      %p114 = scmp.eq.s32.totalorder %s19, 1
      %p115 = por %p113, %p114
      %p117 = scmp.ne.s32.totalorder %s100, %s116
      %p118 = scmp.eq.s32.totalorder %s19, 0
      %p119 = por %p117, %p118
      %p120 = scmp.le.s32.totalorder 1, %s13
      %p121 = scmp.lt.s32.totalorder %s13, 3
      %p122 = pnand %p120, %p121
      %p123 = pneg %p122
      // Predicated region
      $region9: #{tpu_custom_call.1} parent=5 // pred_check
        _
      $region10: #{tpu_custom_call.1} parent=5 // pred_check_branch
        %125 = sbr.rel (%p122) target = $region12
      $region11: #{tpu_custom_call.1} parent=5 // pred_region
        %s126 = ssub.s32 %s13, 1
        // Predicated region
        $region13: #{tpu_custom_call.1} parent=11 // pred_check
          %p127 = pneg %p60
        $region14: #{tpu_custom_call.1} parent=11 // pred_check_branch
          %129 = sbr.rel (%p127) target = $region16
        $region15: #{tpu_custom_call.1} parent=11 // pred_region
          _
        $region16: #{tpu_custom_call.1} parent=11 // pred_fallthru
          _
      $region12: #{tpu_custom_call.1} parent=5 // pred_fallthru
        _
      %p130 = scmp.lt.s32.totalorder %s13, 2
      // Predicated region
      $region17: #{tpu_custom_call.1} parent=5 // pred_check
        %p131 = pneg %p130
      $region18: #{tpu_custom_call.1} parent=5 // pred_check_branch
        %133 = sbr.rel (%p131) target = $region20
      $region19: #{tpu_custom_call.1} parent=5 // pred_region
        // Predicated region
        $region21: #{tpu_custom_call.1} parent=19 // pred_check
          %p134 = pneg %p33
        $region22: #{tpu_custom_call.1} parent=19 // pred_check_branch
          %136 = sbr.rel (%p134) target = $region24
        $region23: #{tpu_custom_call.1} parent=19 // pred_region
          %s137 = smul.u32 4, %s13
          %p138 = scmp.lt.s32.totalorder %s137, 7
          %s139 = scalar_select %p138, %s137, 7
          %s140 = smul.addr %s139, 4
          %s141 = scalar_lea.vmem %s0, %s140
          %s142 = smul.u32 4, %s13
        $region24: #{tpu_custom_call.1} parent=19 // pred_fallthru
          _
      $region20: #{tpu_custom_call.1} parent=5 // pred_fallthru
        _
      %p143 = scmp.le.s32.totalorder 1, %s13
      %p144 = scmp.lt.s32.totalorder %s13, 3
      %p145 = pnand %p143, %p144
      %p146 = pneg %p145
      // Predicated region
      $region25: #{tpu_custom_call.1} parent=5 // pred_check
        _
      $region26: #{tpu_custom_call.1} parent=5 // pred_check_branch
        %148 = sbr.rel (%p145) target = $region28
      $region27: #{tpu_custom_call.1} parent=5 // pred_region
        %s149 = ssub.s32 %s13, 1
        %s150 = smul.u32 4, %s18
        %p151 = scmp.lt.s32.totalorder %s150, 7
        %s152 = scalar_select %p151, %s150, 7
        %s153 = smul.addr %s152, 4
        %s154 = scalar_lea.vmem %s0, %s153
        %p155 = pneg %p39
        %p156 = pneg %p36
        %p157 = pneg %p60
        %p158 = pneg %p57
        %p159 = pneg %p86
        %p160 = pneg %p83
        %s161 = sand.u32 %s73, 1
        %s162 = scalar_lea.sflag [#allocation3], %s161
        %s163 = sand.u32 %s73, 1
        %s164 = smul.addr %s163, 32
        %s165 = scalar_lea.vmem [#allocation2], %s164
        %p166 = pneg %p112
        %p167 = pneg %p109
        %s168 = smul.u32 4, %s18
        %p169 = scmp.lt.s32.totalorder %s168, 7
        %s170 = scalar_select %p169, %s168, 7
        %s171 = smul.addr %s170, 8
        %s172 = scalar_lea.vmem %s3, %s171
        %s173 = smul.u32 4, %s18
        %p174 = scmp.lt.s32.totalorder %s173, 7
        %s175 = scalar_select %p174, %s173, 7
        %s176 = smul.addr %s175, 4
        %s177 = scalar_lea.vmem %s0, %s176
        %s178 = smul.u32 4, %s18
        %s179 = smul.u32 4, %s18
        %s180 = smul.u32 4, %s18
        %p181 = scmp.lt.s32.totalorder %s180, 7
        %s182 = scalar_select %p181, %s180, 7
        %s183 = smul.addr %s182, 8
        %s184 = scalar_lea.vmem %s3, %s183
        %s185 = smul.u32 4, %s18
        %v187 = vld [vmem:[%s177] sm:$0xf]
        %v188 = vld [vmem:[%s177 + $0x4] sm:$0xf]
        %v189 = vld [vmem:[%s177 + $0x8] sm:$0xf]
        %v190 = vld [vmem:[%s177 + $0xc] sm:$0xf]
        %v191 = vunpack.c.l.bf16 %v187
        %v192 = vunpack.c.l.bf16 %v188
        %v193 = vunpack.c.l.bf16 %v189
        %v194 = vunpack.c.l.bf16 %v190
        %vm195 = vcmask 392192
        %v196 = vsel %vm195, %v191, -inf
        %197 = vmax.xlane.f32.xlu0 %v196
        %v198 = vpop.xlane.xlu0 %197
        %v199 = vsel %vm195, %v192, -inf
        %200 = vmax.xlane.f32.xlu0 %v199
        %v201 = vpop.xlane.xlu0 %200
        %v202 = vsel %vm195, %v193, -inf
        %203 = vmax.xlane.f32.xlu0 %v202
        %v204 = vpop.xlane.xlu0 %203
        %v205 = vsel %vm195, %v194, -inf
        %206 = vmax.xlane.f32.xlu0 %v205
        %v207 = vpop.xlane.xlu0 %206
        %vm208 = vcmp.gt.f32.partialorder %v198, -1e+29
        %vm209 = vcmp.gt.f32.partialorder %v201, -1e+29
        %vm210 = vcmp.gt.f32.partialorder %v204, -1e+29
        %vm211 = vcmp.gt.f32.partialorder %v207, -1e+29
        %v212 = vsub.f32 %v191, %v198
        %v213 = vsub.f32 %v192, %v201
        %v214 = vsub.f32 %v193, %v204
        %v215 = vsub.f32 %v194, %v207
        %v216 = vmul.f32 %v212, 1.442695
        %v217 = vpow.pop %v216
        %v218 = vmul.f32 %v213, 1.442695
        %v219 = vpow.pop %v218
        %v220 = vmul.f32 %v214, 1.442695
        %v221 = vpow.pop %v220
        %v222 = vmul.f32 %v215, 1.442695
        %v223 = vpow.pop %v222
        %v224 = vsel %vm195, %v217, 0.0
        %225 = vadd.xlane.f32.xlu0 %v224
        %v226 = vpop.xlane.xlu0 %225
        %v227 = vsel %vm195, %v219, 0.0
        %228 = vadd.xlane.f32.xlu0 %v227
        %v229 = vpop.xlane.xlu0 %228
        %v230 = vsel %vm195, %v221, 0.0
        %231 = vadd.xlane.f32.xlu0 %v230
        %v232 = vpop.xlane.xlu0 %231
        %v233 = vsel %vm195, %v223, 0.0
        %234 = vadd.xlane.f32.xlu0 %v233
        %v235 = vpop.xlane.xlu0 %234
        %v236 = vrcp.pop %v226
        %v237 = vrcp.pop %v229
        %v238 = vrcp.pop %v232
        %v239 = vrcp.pop %v235
        %v240 = vlog2.pop %v226
        %v241 = vmul.f32 %v240, 0.6931472
        %v242 = vlog2.pop %v229
        %v243 = vmul.f32 %v242, 0.6931472
        %v244 = vlog2.pop %v232
        %v245 = vmul.f32 %v244, 0.6931472
        %v246 = vlog2.pop %v235
        %v247 = vmul.f32 %v246, 0.6931472
        %v248 = vadd.f32 %v198, %v241
        %v249 = vadd.f32 %v201, %v243
        %v250 = vadd.f32 %v204, %v245
        %v251 = vadd.f32 %v207, %v247
        %vm252 = vcmask 7168
        %253 = vst.msk [vmem:[%s184] sm:$0xff] %vm252, %v248
        %254 = vst.msk [vmem:[%s184 + $0x8] sm:$0xff] %vm252, %v249
        %255 = vst.msk [vmem:[%s184 + $0x10] sm:$0xff] %vm252, %v250
        %256 = vst.msk [vmem:[%s184 + $0x18] sm:$0xff] %vm252, %v251
        %v257 = vpack.c.bf16 %v219, %v217
        %v258 = vpack.c.bf16 %v223, %v221
        %v259 = vld [vmem:[%s1] sm:$0xf]
        %v260 = vld [vmem:[%s1 + $0x4] sm:$0xf]
        %v261 = vld [vmem:[%s1 + $0x8] sm:$0xf]
        %v262 = vld [vmem:[%s1 + $0xc] sm:$0xf]
        %v263 = vld [vmem:[%s1 + $0x10] sm:$0xf]
        %v264 = vld [vmem:[%s1 + $0x14] sm:$0xf]
        %v271 = vunpack.c.l.b16 %v259
        %v272 = vunpack.c.l.b16 %v260
        %v273 = vunpack.c.l.b16 %v261
        %v274 = vunpack.c.l.b16 %v262
        %v275 = vunpack.c.l.b16 %v263
        %v276 = vunpack.c.l.b16 %v264
        %v277 = vpack.c.b16 %v272, %v271
        %v278 = vpack.c.b16 %v274, %v273
        %v279 = vpack.c.b16 %v276, %v275
        %v284 = vsel %vm195, %v257, 0
        %v287 = vsel %vm195, %v258, 0
        %289 = vmatprep.subr.bf16.mxu0 0
        %290 = vmatpush1.bf16.msra.mxu0 %v277
        %291 = vmatprep.subr.bf16.mxu0 0
        %292 = vmatpush1.bf16.msra.mxu0 %v278
        %293 = vmatprep.subr.bf16.mxu0 0
        %294 = vmatpush1.bf16.msra.mxu0 %v279
        %295 = vmatprep.subr.bf16.mxu0 0
        %296 = vmatpush1.bf16.msra.mxu0 0
        %297 = vmatprep.subr.bf16.mxu0 0
        %298 = vmatpush1.bf16.msra.mxu0 0
        %299 = vmatprep.subr.bf16.mxu0 0
        %300 = vmatpush1.bf16.msra.mxu0 0
        %301 = vmatprep.subr.bf16.mxu0 0
        %302 = vmatpush1.bf16.msra.mxu0 0
        %303 = vmatprep.subr.bf16.mxu0 0
        %304 = vmatpush1.bf16.msra.mxu0 0
        %305 = vmatprep.subr.bf16.mxu0 0
        %306 = vmatpush1.bf16.msra.mxu0 0
        %307 = vmatprep.subr.bf16.mxu0 0
        %308 = vmatpush1.bf16.msra.mxu0 0
        %309 = vmatprep.subr.bf16.mxu0 0
        %310 = vmatpush1.bf16.msra.mxu0 0
        %311 = vmatprep.subr.bf16.mxu0 0
        %312 = vmatpush1.bf16.msra.mxu0 0
        %313 = vmatprep.subr.bf16.mxu0 0
        %314 = vmatpush1.bf16.msra.mxu0 0
        %315 = vmatprep.subr.bf16.mxu0 0
        %316 = vmatpush1.bf16.msra.mxu0 0
        %317 = vmatprep.subr.bf16.mxu0 0
        %318 = vmatpush1.bf16.msra.mxu0 0
        %319 = vmatprep.subr.bf16.mxu0 0
        %320 = vmatpush1.bf16.msra.mxu0 0
        %321 = vmatprep.mubr.bf16.mxu0 0
        %322 = vmatmul.mubr.bf16.gmra.mrb[0].mxu0 %v284
        %v323 = vpop.f32.mrb[0].mxu0
        %v324 = vadd.f32 0.0, %v323
        %v325 = vpop.f32.mrb[0].mxu0
        %v326 = vpop.f32.mrb[0].mxu0
        %v327 = vadd.f32 0.0, %v326
        %v328 = vpop.f32.mrb[0].mxu0
        %329 = vmatprep.mubr.bf16.mxu0 0
        %330 = vmatmul.mubr.bf16.gmra.mrb[0].mxu0 %v287
        %v331 = vpop.f32.mrb[0].mxu0
        %v332 = vadd.f32 0.0, %v331
        %v333 = vpop.f32.mrb[0].mxu0
        %v334 = vpop.f32.mrb[0].mxu0
        %v335 = vadd.f32 0.0, %v334
        %v336 = vpop.f32.mrb[0].mxu0
        %337 = vdwg.mxu0
        %v338 = vsel %vm208, %v236, 0.0
        %v339 = vsel %vm209, %v237, 0.0
        %v340 = vsel %vm210, %v238, 0.0
        %v341 = vsel %vm211, %v239, 0.0
        %v342 = vmul.f32 %v324, %v338
        %v343 = vmul.f32 %v327, %v339
        %v344 = vmul.f32 %v332, %v340
        %v345 = vmul.f32 %v335, %v341
        %v346 = vmax.f32 %v342, 0.0
        %v347 = vmax.f32 %v343, 0.0
        %v348 = vmax.f32 %v344, 0.0
        %v349 = vmax.f32 %v345, 0.0
        %350 = vst [vmem:[%s165] sm:$0xff] %v346
        %351 = vst [vmem:[%s165 + $0x8] sm:$0xff] %v347
        %352 = vst [vmem:[%s165 + $0x10] sm:$0xff] %v348
        %353 = vst [vmem:[%s165 + $0x18] sm:$0xff] %v349
        %s354 = sand.u32 %s73, 1
        %s355 = scalar_lea.sflag [#allocation3], %s354
        %s356 = sand.u32 %s73, 1
        %s357 = smul.addr %s356, 32
        %s358 = scalar_lea.vmem [#allocation2], %s357
        %s359 = smul.u32 4, %s18
        %p360 = scmp.lt.s32.totalorder %s359, 7
        %s361 = scalar_select %p360, %s359, 7
        %s362 = smul.addr %s361, 8
        %s363 = scalar_lea.vmem %s3, %s362
        // Predicated region
        $region29: #{tpu_custom_call.1} parent=27 // pred_check
          %p364 = pneg %p83
        $region30: #{tpu_custom_call.1} parent=27 // pred_check_branch
          %366 = sbr.rel (%p364) target = $region32
        $region31: #{tpu_custom_call.1} parent=27 // pred_region
          %s367 = smul.u32 4, %s18
          %s369 = ssub.s32 512, 512
          %370 = vsyncadd %s355, %s369
          %s371 = smul.addr %s367, 128
          %s372 = scalar_lea.hbm %s2, %s371
          %s373 = sshll.u32 %s358, 4
          %s374 = int_to_ptr.vmem [resolvable:$true] %s373
          %379 = dma.vmem_to_hbm [thread:$0]  %s374, 512, %s372, %s355, 128, 128, 8
        $region32: #{tpu_custom_call.1} parent=27 // pred_fallthru
          _
        // Predicated region
        $region33: #{tpu_custom_call.1} parent=27 // pred_check
          %p380 = pneg %p109
        $region34: #{tpu_custom_call.1} parent=27 // pred_check_branch
          %382 = sbr.rel (%p380) target = $region36
        $region35: #{tpu_custom_call.1} parent=27 // pred_region
          %s383 = smul.u32 4, %s18
        $region36: #{tpu_custom_call.1} parent=27 // pred_fallthru
          _
      $region28: #{tpu_custom_call.1} parent=5 // pred_fallthru
        _
      %p384 = scmp.le.s32.totalorder 2, %s13
      // Predicated region
      $region37: #{tpu_custom_call.1} parent=5 // pred_check
        %p385 = pneg %p384
      $region38: #{tpu_custom_call.1} parent=5 // pred_check_branch
        %387 = sbr.rel (%p385) target = $region40
      $region39: #{tpu_custom_call.1} parent=5 // pred_region
        %s388 = ssub.s32 %s13, 2
        // Predicated region
        $region41: #{tpu_custom_call.1} parent=39 // pred_check
          %p389 = pneg %p89
        $region42: #{tpu_custom_call.1} parent=39 // pred_check_branch
          %391 = sbr.rel (%p389) target = $region44
        $region43: #{tpu_custom_call.1} parent=39 // pred_region
          %s392 = sand.u32 %s74, 1
          %s393 = scalar_lea.sflag [#allocation3], %s392
          %s394 = sand.u32 %s74, 1
          %s395 = smul.addr %s394, 32
          %s396 = scalar_lea.vmem [#allocation2], %s395
          %397 = dma.done %s393, 512
        $region44: #{tpu_custom_call.1} parent=39 // pred_fallthru
          _
        // Predicated region
        $region45: #{tpu_custom_call.1} parent=39 // pred_check
          %p398 = pneg %p115
        $region46: #{tpu_custom_call.1} parent=39 // pred_check_branch
          %400 = sbr.rel (%p398) target = $region48
        $region47: #{tpu_custom_call.1} parent=39 // pred_region
          %s401 = smul.u32 4, %s19
          %p402 = scmp.lt.s32.totalorder %s401, 7
          %s403 = scalar_select %p402, %s401, 7
          %s404 = smul.addr %s403, 8
          %s405 = scalar_lea.vmem %s3, %s404
        $region48: #{tpu_custom_call.1} parent=39 // pred_fallthru
          _
      $region40: #{tpu_custom_call.1} parent=5 // pred_fallthru
        _
    $region6: #{tpu_custom_call.1} parent=1 // loop_footer
      %s17 = sadd.s32 1, %s13
    $region7: #{tpu_custom_call.1} parent=1 // loop_footer_branch
      %12 = sbr.rel target = $region3
    $region8: #{tpu_custom_call.1} parent=1 // loop_exit
      _
    %406 = vsyncpa [#allocation3], 1
    %s407 = scalar_lea.sflag [#allocation3], 1
    %408 = vsyncpa %s407, 1

</llo_original>
